<compile_context>
chip_gen: v5e
topology: v5e:2x2
jax: 0.10.0
libtpu: 0.0.40
codegen_flags: <defaults>
</compile_context>

<pallas_src>
import jax
import jax.numpy as jnp
from jax.experimental import pallas as pl
from jax.experimental.pallas import tpu as pltpu


def _mlp_kernel(x_ref, w0_ref, b0_ref, w1_ref, b1_ref, w2_ref, b2_ref, o_ref):
    cd = w1_ref.dtype  # MXU dtype for the hidden layers; accumulation is always f32.
    # Layer 0: Linear + Tanh (x / w0 kept at the input dtype to preserve precision).
    h = jnp.dot(x_ref[...], w0_ref[...], preferred_element_type=jnp.float32)
    h = jnp.tanh(h + b0_ref[...])                  # f32 elementwise (v5e-safe)
    # Layer 1: Linear + Tanh (lane-padded to 128 hidden columns).
    h = jnp.dot(h.astype(cd), w1_ref[...], preferred_element_type=jnp.float32)
    h = jnp.tanh(h + b1_ref[...])
    # Layer 2 (final): Linear, no activation.  Output is the true (bt, d_out) tile.
    y = jnp.dot(h.astype(cd), w2_ref[...], preferred_element_type=jnp.float32)
    o_ref[...] = (y + b2_ref[...]).astype(o_ref.dtype)


def _round_up(n, m):
    return ((n + m - 1) // m) * m


def _itemsize(dt):
    return jnp.dtype(dt).itemsize


def _tpu_generation():
    """Best-effort TPU generation detection; 'unknown' falls back to safe defaults."""
    try:
        kind = jax.devices()[0].device_kind.lower()
    except Exception:
        return "unknown"
    if "v5" in kind:
        return "v5e"
    if "v6" in kind:
        return "v6e"
    if "v7" in kind or "7x" in kind:
        return "v7x"
    return "unknown"


def _choose_batch_tile(batch, requested, compute_dtype, gen):
    # bf16 packs 16 rows per sublane group; require 16-row alignment there.
    align = 16 if jnp.dtype(compute_dtype) == jnp.dtype(jnp.bfloat16) else 8
    if requested is not None:
        assert batch % requested == 0, "batch must be divisible by batch_tile"
        assert requested == batch or requested % align == 0, (
            f"batch_tile must be a multiple of {align} or the full batch")
        return requested
    # Per-generation tile cap (VMEM-derived; v7x has only 64 MiB per TensorCore).
    max_tile = {"v5e": 8192, "v6e": 16384, "v7x": 8192}.get(gen, 8192)
    tile = batch
    # Megacore split only on v7x, and only when each core gets enough rows to
    # amortize the ~0.35us/step pipeline overhead and duplicated weight DMAs.
    if (gen == "v7x" and batch % 2 == 0 and (batch // 2) % align == 0
            and batch // 2 >= 1024):
        tile = batch // 2
    while tile > max_tile and tile % 2 == 0 and (tile // 2) % align == 0:
        tile //= 2
    return tile


def _vmem_limit_bytes(gen, bt, d_in, h0p, h1p, d_out,
                      in_isz, cd_isz, out_isz, weights_bytes):
    # Double-buffered batch-tiled I/O + intermediate activation (f32 + cast copy)
    # + weights (double-buffered by default even though grid-invariant).
    io = 2 * bt * (d_in * in_isz + d_out * out_isz)
    interm = 2 * bt * max(h0p, h1p) * (4 + cd_isz)
    est = io + interm + 2 * weights_bytes
    cap = {"v5e": 96 << 20, "v6e": 96 << 20, "v7x": 48 << 20}.get(gen, 48 << 20)
    return int(min(cap, max(est + (8 << 20), 32 << 20)))


def dense_nn_forward(x, params, *, batch_tile=None, compute_dtype=None):
    """Fused 3-layer MLP forward (layers = [d_in, h0, h1, d_out]).

    compute_dtype: MXU dtype for the hidden layers (bf16 is valid on v5e/v6e/v7x);
    accumulation, bias-add and tanh are always float32.  Layer 0 runs at x.dtype
    so input precision is preserved; pre-cast x to bf16 for maximum DMA savings.
    """
    (w0, b0), (w1, b1), (w2, b2) = params
    B, d_in = x.shape
    h0, h1, d_out = w0.shape[1], w1.shape[1], w2.shape[1]
    out_dtype = x.dtype
    if compute_dtype is None:
        compute_dtype = x.dtype

    gen = _tpu_generation()
    bt = _choose_batch_tile(B, batch_tile, compute_dtype, gen)
    grid = (B // bt,)

    # Lane-pad the hidden widths to multiples of 128 (zero padding is exact).
    # Note (model-shape lever): hidden widths that are multiples of 256 (v6e/v7x)
    # or 128 (v5e) natively would use the MXU far better than 64.
    h0p = _round_up(h0, 128)
    h1p = _round_up(h1, 128)

    in_dtype = x.dtype            # layer 0 operands stay at the input's dtype
    w0p = jnp.zeros((d_in, h0p), in_dtype).at[:, :h0].set(w0.astype(in_dtype))
    b0p = jnp.zeros((1, h0p), jnp.float32).at[:, :h0].set(b0.astype(jnp.float32))
    w1p = jnp.zeros((h0p, h1p), compute_dtype).at[:h0, :h1].set(w1.astype(compute_dtype))
    b1p = jnp.zeros((1, h1p), jnp.float32).at[:, :h1].set(b1.astype(jnp.float32))
    w2p = jnp.zeros((h1p, d_out), compute_dtype).at[:h1, :].set(w2.astype(compute_dtype))
    b2f = b2.astype(jnp.float32).reshape(1, d_out)

    operands = (x, w0p, b0p, w1p, b1p, w2p, b2f)
    weights_bytes = sum(int(a.size) * a.dtype.itemsize for a in operands[1:])

    # Advisory cost estimate: logical (unpadded) work only.
    flops = 2 * B * (d_in * h0 + h0 * h1 + h1 * d_out)
    transcendentals = B * (h0 + h1)
    bytes_accessed = (sum(int(a.size) * a.dtype.itemsize for a in operands)
                      + B * d_out * _itemsize(out_dtype))

    vmem_limit = _vmem_limit_bytes(
        gen, bt, d_in, h0p, h1p, d_out,
        _itemsize(in_dtype), _itemsize(compute_dtype), _itemsize(out_dtype),
        weights_bytes)

    full = lambda shape: pl.BlockSpec(shape, lambda i: (0, 0))  # grid-invariant

    out = pl.pallas_call(
        _mlp_kernel,
        out_shape=jax.ShapeDtypeStruct((B, d_out), out_dtype),
        grid_spec=pltpu.PrefetchScalarGridSpec(
            num_scalar_prefetch=0,
            grid=grid,
            in_specs=[
                pl.BlockSpec((bt, d_in), lambda i: (i, 0)),     # x batch tile
                full((d_in, h0p)), full((1, h0p)),
                full((h0p, h1p)),  full((1, h1p)),
                full((h1p, d_out)), full((1, d_out)),
            ],
            out_specs=pl.BlockSpec((bt, d_out), lambda i: (i, 0)),
        ),
        compiler_params=pltpu.CompilerParams(
            dimension_semantics=("parallel",),
            vmem_limit_bytes=vmem_limit,
        ),
        cost_estimate=pl.CostEstimate(
            flops=flops,
            transcendentals=transcendentals,
            bytes_accessed=bytes_accessed,
        ),
    )(*operands)
    return out


def init_params(key, layers):
    """Deterministic init matching torch.nn.Linear(layers[i], layers[i+1]) shapes.
    Stored transposed: W has shape (in, out); bias stored as (1, out)."""
    params = []
    for i in range(len(layers) - 1):
        key, kw, kb = jax.random.split(key, 3)
        fan_in = layers[i]
        bound = 1.0 / jnp.sqrt(fan_in)
        w = jax.random.uniform(kw, (layers[i], layers[i + 1]),
                               minval=-bound, maxval=bound, dtype=jnp.float32)
        b = jax.random.uniform(kb, (1, layers[i + 1]),
                               minval=-bound, maxval=bound, dtype=jnp.float32)
        params.append((w, b))
    return params


def dense_nn_reference(x, params):
    """Plain-JAX reference of DenseNN.forward for validation."""
    (w0, b0), (w1, b1), (w2, b2) = params
    h = jnp.tanh(x @ w0 + b0)
    h = jnp.tanh(h @ w1 + b1)
    return h @ w2 + b2


if __name__ == "__main__":
    # DenseNN(layers=[16, 64, 64, 8]) -> Linear+Tanh, Linear+Tanh, Linear
    layers = [16, 64, 64, 8]
    batch = 128

    key = jax.random.PRNGKey(0)
    key, kx = jax.random.split(key)
    x = jax.random.normal(kx, (batch, layers[0]), dtype=jnp.float32)
    params = init_params(key, layers)

    y_ref = dense_nn_reference(x, params)

    # float32 path (exact-precision check).
    y = jax.block_until_ready(dense_nn_forward(x, params))
    assert y.shape == (batch, layers[-1])
    assert jnp.allclose(y, y_ref, atol=1e-5, rtol=1e-5), "f32 Pallas output mismatch"

    # bf16 hidden-layer MXU path (f32 accumulation, layer 0 stays f32).
    y_bf16 = jax.block_until_ready(
        dense_nn_forward(x, params, compute_dtype=jnp.bfloat16))
    assert y_bf16.shape == (batch, layers[-1])
    assert jnp.allclose(y_bf16, y_ref, atol=5e-2, rtol=5e-2), "bf16 Pallas output mismatch"

    # Explicit-tile path (exercises the multi-step grid / batch tiling).
    y_tiled = jax.block_until_ready(dense_nn_forward(x, params, batch_tile=64))
    assert jnp.allclose(y_tiled, y_ref, atol=1e-5, rtol=1e-5), "tiled Pallas output mismatch"

    print("KERNEL_OK")
</pallas_src>

<mosaic_0001>
module attributes {stable_mosaic.version = 11 : i64} {
  func.func @_mlp_kernel(%arg0: i32, %arg1: memref<128x16xf32, #tpu.memory_space<vmem>>, %arg2: memref<16x128xf32, #tpu.memory_space<vmem>>, %arg3: memref<1x128xf32, #tpu.memory_space<vmem>>, %arg4: memref<128x128xf32, #tpu.memory_space<vmem>>, %arg5: memref<1x128xf32, #tpu.memory_space<vmem>>, %arg6: memref<128x8xf32, #tpu.memory_space<vmem>>, %arg7: memref<1x8xf32, #tpu.memory_space<vmem>>, %arg8: memref<128x8xf32, #tpu.memory_space<vmem>>) attributes {dimension_semantics = [#tpu.dimension_semantics<parallel>], iteration_bounds = array<i64: 1>, scalar_prefetch = 0 : i64, scratch_operands = 0 : i64, tpu.core_type = #tpu.core_type<tc>, window_params = [{transform_indices = @transform_0, window_bounds = array<i64: 128, 16>}, {pipeline_mode = #tpu.pipeline_mode<synchronous>, transform_indices = @transform_1, window_bounds = array<i64: 16, 128>}, {pipeline_mode = #tpu.pipeline_mode<synchronous>, transform_indices = @transform_2, window_bounds = array<i64: 1, 128>}, {pipeline_mode = #tpu.pipeline_mode<synchronous>, transform_indices = @transform_3, window_bounds = array<i64: 128, 128>}, {pipeline_mode = #tpu.pipeline_mode<synchronous>, transform_indices = @transform_4, window_bounds = array<i64: 1, 128>}, {pipeline_mode = #tpu.pipeline_mode<synchronous>, transform_indices = @transform_5, window_bounds = array<i64: 128, 8>}, {pipeline_mode = #tpu.pipeline_mode<synchronous>, transform_indices = @transform_6, window_bounds = array<i64: 1, 8>}, {transform_indices = @transform_7, window_bounds = array<i64: 128, 8>}]} {
    %c0 = arith.constant 0 : index
    %c0_0 = arith.constant 0 : index
    %0 = vector.load %arg1[%c0, %c0_0] : memref<128x16xf32, #tpu.memory_space<vmem>>, vector<128x16xf32>
    %c0_1 = arith.constant 0 : index
    %c0_2 = arith.constant 0 : index
    %1 = vector.load %arg2[%c0_1, %c0_2] : memref<16x128xf32, #tpu.memory_space<vmem>>, vector<16x128xf32>
    %cst = arith.constant dense<0.000000e+00> : vector<128x128xf32>
    %2 = tpu.matmul %0, %1, %cst {dimension_numbers = #tpu.dot_dimension_numbers<[1], [0], [0], [1], [0, 0, 1, 1], [], []>} : vector<128x16xf32>, vector<16x128xf32>, vector<128x128xf32> -> vector<128x128xf32>
    %c0_3 = arith.constant 0 : index
    %c0_4 = arith.constant 0 : index
    %3 = vector.load %arg3[%c0_3, %c0_4] : memref<1x128xf32, #tpu.memory_space<vmem>>, vector<1x128xf32>
    %4 = vector.broadcast %3 : vector<1x128xf32> to vector<128x128xf32>
    %5 = arith.addf %2, %4 : vector<128x128xf32>
    %6 = math.tanh %5 : vector<128x128xf32>
    %c0_5 = arith.constant 0 : index
    %c0_6 = arith.constant 0 : index
    %7 = vector.load %arg4[%c0_5, %c0_6] : memref<128x128xf32, #tpu.memory_space<vmem>>, vector<128x128xf32>
    %cst_7 = arith.constant dense<0.000000e+00> : vector<128x128xf32>
    %8 = tpu.matmul %6, %7, %cst_7 {dimension_numbers = #tpu.dot_dimension_numbers<[1], [0], [0], [1], [0, 0, 1, 1], [], []>} : vector<128x128xf32>, vector<128x128xf32>, vector<128x128xf32> -> vector<128x128xf32>
    %c0_8 = arith.constant 0 : index
    %c0_9 = arith.constant 0 : index
    %9 = vector.load %arg5[%c0_8, %c0_9] : memref<1x128xf32, #tpu.memory_space<vmem>>, vector<1x128xf32>
    %10 = vector.broadcast %9 : vector<1x128xf32> to vector<128x128xf32>
    %11 = arith.addf %8, %10 : vector<128x128xf32>
    %12 = math.tanh %11 : vector<128x128xf32>
    %c0_10 = arith.constant 0 : index
    %c0_11 = arith.constant 0 : index
    %13 = vector.load %arg6[%c0_10, %c0_11] : memref<128x8xf32, #tpu.memory_space<vmem>>, vector<128x8xf32>
    %cst_12 = arith.constant dense<0.000000e+00> : vector<128x8xf32>
    %14 = tpu.matmul %12, %13, %cst_12 {dimension_numbers = #tpu.dot_dimension_numbers<[1], [0], [0], [1], [0, 0, 1, 1], [], []>} : vector<128x128xf32>, vector<128x8xf32>, vector<128x8xf32> -> vector<128x8xf32>
    %c0_13 = arith.constant 0 : index
    %c0_14 = arith.constant 0 : index
    %15 = vector.load %arg7[%c0_13, %c0_14] : memref<1x8xf32, #tpu.memory_space<vmem>>, vector<1x8xf32>
    %16 = vector.broadcast %15 : vector<1x8xf32> to vector<128x8xf32>
    %17 = arith.addf %14, %16 : vector<128x8xf32>
    %c0_15 = arith.constant 0 : index
    %c0_16 = arith.constant 0 : index
    %18 = vector.load %arg8[%c0_15, %c0_16] : memref<128x8xf32, #tpu.memory_space<vmem>>, vector<128x8xf32>
    tpu.vector_store %arg8[%c0_15, %c0_16], %17 {strides = array<i32>} : memref<128x8xf32, #tpu.memory_space<vmem>>, vector<128x8xf32>,
    return
  }
  func.func @transform_0(%arg0: i32) -> (i32, i32) {
    %c0_i32 = arith.constant 0 : i32
    %c0_i32_0 = arith.constant 0 : i32
    return %arg0, %c0_i32 : i32, i32
  }
  func.func @transform_1(%arg0: i32) -> (i32, i32) {
    %c0_i32 = arith.constant 0 : i32
    %c0_i32_0 = arith.constant 0 : i32
    %c0_i32_1 = arith.constant 0 : i32
    return %c0_i32, %c0_i32_0 : i32, i32
  }
  func.func @transform_2(%arg0: i32) -> (i32, i32) {
    %c0_i32 = arith.constant 0 : i32
    %c0_i32_0 = arith.constant 0 : i32
    %c0_i32_1 = arith.constant 0 : i32
    return %c0_i32, %c0_i32_0 : i32, i32
  }
  func.func @transform_3(%arg0: i32) -> (i32, i32) {
    %c0_i32 = arith.constant 0 : i32
    %c0_i32_0 = arith.constant 0 : i32
    %c0_i32_1 = arith.constant 0 : i32
    return %c0_i32, %c0_i32_0 : i32, i32
  }
  func.func @transform_4(%arg0: i32) -> (i32, i32) {
    %c0_i32 = arith.constant 0 : i32
    %c0_i32_0 = arith.constant 0 : i32
    %c0_i32_1 = arith.constant 0 : i32
    return %c0_i32, %c0_i32_0 : i32, i32
  }
  func.func @transform_5(%arg0: i32) -> (i32, i32) {
    %c0_i32 = arith.constant 0 : i32
    %c0_i32_0 = arith.constant 0 : i32
    %c0_i32_1 = arith.constant 0 : i32
    return %c0_i32, %c0_i32_0 : i32, i32
  }
  func.func @transform_6(%arg0: i32) -> (i32, i32) {
    %c0_i32 = arith.constant 0 : i32
    %c0_i32_0 = arith.constant 0 : i32
    %c0_i32_1 = arith.constant 0 : i32
    return %c0_i32, %c0_i32_0 : i32, i32
  }
  func.func @transform_7(%arg0: i32) -> (i32, i32) {
    %c0_i32 = arith.constant 0 : i32
    %c0_i32_0 = arith.constant 0 : i32
    return %arg0, %c0_i32 : i32, i32
  }
}

</mosaic_0001>

<llo_original>
// kernel: tpu_custom_call.1
$region0: #{tpu_custom_call.1}
  #allocation0 [shape = 'u32[]', space=smem, size = 0x4, offset = 0x4, fixed_abs, tag = 'smem constant byte address 0x4 - core index']
  #allocation1 [shape = 'u32[72,128]{1,0:T(1,128)}', space=vmem, size = 0x9000, scoped, tag = 'internal scratch']
  %s0 = inlined_call_operand.vmem [shape: f32[128,16], index: 0, kind: input, shape index: {}]
  %s1 = inlined_call_operand.vmem [shape: f32[16,128], index: 1, kind: input, shape index: {}]
  %s2 = inlined_call_operand.vmem [shape: f32[1,128], index: 2, kind: input, shape index: {}]
  %s3 = inlined_call_operand.vmem [shape: f32[128,128], index: 3, kind: input, shape index: {}]
  %s4 = inlined_call_operand.vmem [shape: f32[1,128], index: 4, kind: input, shape index: {}]
  %s5 = inlined_call_operand.vmem [shape: f32[128,8], index: 5, kind: input, shape index: {}]
  %s6 = inlined_call_operand.vmem [shape: f32[1,8], index: 6, kind: input, shape index: {}]
  %s7 = inlined_call_operand.vmem [shape: f32[128,8], index: 7, kind: output, shape index: {}]
  %s8 = sld [smem:[#allocation0]]
  $region38: #{tpu_custom_call.1} parent=0
    _
  %s10 = ssub.s32 1, %s8
  %s11 = scalar_select 0, %s10, %s8
  // Predicated region
  $region2: #{tpu_custom_call.1} parent=0 // pred_check
    _
  $region3: #{tpu_custom_call.1} parent=0 // pred_check_branch
    %13 = sbr.rel (0) target = $region5
  $region4: #{tpu_custom_call.1} parent=0 // pred_region
    _
  $region5: #{tpu_custom_call.1} parent=0 // pred_fallthru
    _
  // Predicated region
  $region6: #{tpu_custom_call.1} parent=0 // pred_check
    _
  $region7: #{tpu_custom_call.1} parent=0 // pred_check_branch
    %15 = sbr.rel (0) target = $region9
  $region8: #{tpu_custom_call.1} parent=0 // pred_region
    _
  $region9: #{tpu_custom_call.1} parent=0 // pred_fallthru
    _
  // Predicated region
  $region10: #{tpu_custom_call.1} parent=0 // pred_check
    _
  $region11: #{tpu_custom_call.1} parent=0 // pred_check_branch
    %17 = sbr.rel (0) target = $region13
  $region12: #{tpu_custom_call.1} parent=0 // pred_region
    _
  $region13: #{tpu_custom_call.1} parent=0 // pred_fallthru
    _
  // Predicated region
  $region14: #{tpu_custom_call.1} parent=0 // pred_check
    _
  $region15: #{tpu_custom_call.1} parent=0 // pred_check_branch
    %19 = sbr.rel (0) target = $region17
  $region16: #{tpu_custom_call.1} parent=0 // pred_region
    _
  $region17: #{tpu_custom_call.1} parent=0 // pred_fallthru
    _
  // Predicated region
  $region18: #{tpu_custom_call.1} parent=0 // pred_check
    _
  $region19: #{tpu_custom_call.1} parent=0 // pred_check_branch
    %21 = sbr.rel (0) target = $region21
  $region20: #{tpu_custom_call.1} parent=0 // pred_region
    _
  $region21: #{tpu_custom_call.1} parent=0 // pred_fallthru
    _
  // Predicated region
  $region22: #{tpu_custom_call.1} parent=0 // pred_check
    _
  $region23: #{tpu_custom_call.1} parent=0 // pred_check_branch
    %23 = sbr.rel (0) target = $region25
  $region24: #{tpu_custom_call.1} parent=0 // pred_region
    _
  $region25: #{tpu_custom_call.1} parent=0 // pred_fallthru
    _
  // Predicated region
  $region26: #{tpu_custom_call.1} parent=0 // pred_check
    _
  $region27: #{tpu_custom_call.1} parent=0 // pred_check_branch
    %25 = sbr.rel (0) target = $region29
  $region28: #{tpu_custom_call.1} parent=0 // pred_region
    _
  $region29: #{tpu_custom_call.1} parent=0 // pred_fallthru
    _
  %v26 = vld [vmem:[%s0] sm:$0xff]
  %v27 = vld [vmem:[%s0 + $0x8] sm:$0xff]
  %v28 = vld [vmem:[%s0 + $0x10] sm:$0xff]
  %v29 = vld [vmem:[%s0 + $0x18] sm:$0xff]
  %v30 = vld [vmem:[%s0 + $0x20] sm:$0xff]
  %v31 = vld [vmem:[%s0 + $0x28] sm:$0xff]
  %v32 = vld [vmem:[%s0 + $0x30] sm:$0xff]
  %v33 = vld [vmem:[%s0 + $0x38] sm:$0xff]
  %v34 = vld [vmem:[%s0 + $0x40] sm:$0xff]
  %v35 = vld [vmem:[%s0 + $0x48] sm:$0xff]
  %v36 = vld [vmem:[%s0 + $0x50] sm:$0xff]
  %v37 = vld [vmem:[%s0 + $0x58] sm:$0xff]
  %v38 = vld [vmem:[%s0 + $0x60] sm:$0xff]
  %v39 = vld [vmem:[%s0 + $0x68] sm:$0xff]
  %v40 = vld [vmem:[%s0 + $0x70] sm:$0xff]
  %v41 = vld [vmem:[%s0 + $0x78] sm:$0xff]
  %v42 = vld [vmem:[%s1] sm:$0xff]
  %v43 = vld [vmem:[%s1 + $0x8] sm:$0xff]
  %v44 = vld [vmem:[%s2] sm:$0x1]
  %v46 = vperm.slane %v44, 0
  %vm48 = vcmask 130048
  %v50 = vsel %vm48, %v26, 0
  %v53 = vsel %vm48, %v27, 0
  %v56 = vsel %vm48, %v28, 0
  %v59 = vsel %vm48, %v29, 0
  %v62 = vsel %vm48, %v30, 0
  %v65 = vsel %vm48, %v31, 0
  %v68 = vsel %vm48, %v32, 0
  %v71 = vsel %vm48, %v33, 0
  %v74 = vsel %vm48, %v34, 0
  %v77 = vsel %vm48, %v35, 0
  %v80 = vsel %vm48, %v36, 0
  %v83 = vsel %vm48, %v37, 0
  %v86 = vsel %vm48, %v38, 0
  %v89 = vsel %vm48, %v39, 0
  %v92 = vsel %vm48, %v40, 0
  %v95 = vsel %vm48, %v41, 0
  %97 = vmatpush.msra.mxu0 0.0
  %98 = vmatpush.msra.mxu0 0.0
  %99 = vmatpush.msra.mxu0 0.0
  %100 = vmatpush.msra.mxu0 0.0
  %101 = vmatpush.msra.mxu0 0.0
  %102 = vmatpush.msra.mxu0 0.0
  %103 = vmatpush.msra.mxu0 0.0
  %104 = vmatpush.msra.mxu0 0.0
  %105 = vmatpush.msra.mxu0 0.0
  %106 = vmatpush.msra.mxu0 0.0
  %107 = vmatpush.msra.mxu0 0.0
  %108 = vmatpush.msra.mxu0 0.0
  %109 = vmatpush.msra.mxu0 0.0
  %110 = vmatpush.msra.mxu0 0.0
  %111 = vmatpush.msra.mxu0 %v43
  %112 = vmatpush.msra.mxu0 %v42
  %113 = vmatmul.f32.gmra.mxu0 %v50
  %v114 = vpop.f32.mrf.mxu0
  %v115 = vadd.f32 %v46, %v114
  %116 = vmatmul.f32.gmra.mxu0 %v53
  %v117 = vpop.f32.mrf.mxu0
  %v118 = vadd.f32 %v46, %v117
  %119 = vmatmul.f32.gmra.mxu0 %v56
  %v120 = vpop.f32.mrf.mxu0
  %v121 = vadd.f32 %v46, %v120
  %122 = vmatmul.f32.gmra.mxu0 %v59
  %v123 = vpop.f32.mrf.mxu0
  %v124 = vadd.f32 %v46, %v123
  %125 = vmatmul.f32.gmra.mxu0 %v62
  %v126 = vpop.f32.mrf.mxu0
  %v127 = vadd.f32 %v46, %v126
  %128 = vmatmul.f32.gmra.mxu0 %v65
  %v129 = vpop.f32.mrf.mxu0
  %v130 = vadd.f32 %v46, %v129
  %131 = vmatmul.f32.gmra.mxu0 %v68
  %v132 = vpop.f32.mrf.mxu0
  %v133 = vadd.f32 %v46, %v132
  %134 = vmatmul.f32.gmra.mxu0 %v71
  %v135 = vpop.f32.mrf.mxu0
  %v136 = vadd.f32 %v46, %v135
  %137 = vmatmul.f32.gmra.mxu0 %v74
  %v138 = vpop.f32.mrf.mxu0
  %v139 = vadd.f32 %v46, %v138
  %140 = vmatmul.f32.gmra.mxu0 %v77
  %v141 = vpop.f32.mrf.mxu0
  %v142 = vadd.f32 %v46, %v141
  %143 = vmatmul.f32.gmra.mxu0 %v80
  %v144 = vpop.f32.mrf.mxu0
  %v145 = vadd.f32 %v46, %v144
  %146 = vmatmul.f32.gmra.mxu0 %v83
  %v147 = vpop.f32.mrf.mxu0
  %v148 = vadd.f32 %v46, %v147
  %149 = vmatmul.f32.gmra.mxu0 %v86
  %v150 = vpop.f32.mrf.mxu0
  %v151 = vadd.f32 %v46, %v150
  %152 = vmatmul.f32.gmra.mxu0 %v89
  %v153 = vpop.f32.mrf.mxu0
  %v154 = vadd.f32 %v46, %v153
  %155 = vmatmul.f32.gmra.mxu0 %v92
  %v156 = vpop.f32.mrf.mxu0
  %v157 = vadd.f32 %v46, %v156
  %158 = vmatmul.f32.gmra.mxu0 %v95
  %v159 = vpop.f32.mrf.mxu0
  %v160 = vadd.f32 %v46, %v159
  %161 = vdwg.mxu0
  %v162 = vtanh.pop %v115
  %v163 = vtanh.pop %v118
  %v164 = vtanh.pop %v121
  %v165 = vtanh.pop %v124
  %v166 = vtanh.pop %v127
  %v167 = vtanh.pop %v130
  %v168 = vtanh.pop %v133
  %v169 = vtanh.pop %v136
  %v170 = vtanh.pop %v139
  %v171 = vtanh.pop %v142
  %v172 = vtanh.pop %v145
  %v173 = vtanh.pop %v148
  %v174 = vtanh.pop %v151
  %v175 = vtanh.pop %v154
  %v176 = vtanh.pop %v157
  %v177 = vtanh.pop %v160
  %v178 = vld [vmem:[%s3] sm:$0xff]
  %v179 = vld [vmem:[%s3 + $0x8] sm:$0xff]
  %v180 = vld [vmem:[%s3 + $0x10] sm:$0xff]
  %v181 = vld [vmem:[%s3 + $0x18] sm:$0xff]
  %v182 = vld [vmem:[%s3 + $0x20] sm:$0xff]
  %v183 = vld [vmem:[%s3 + $0x28] sm:$0xff]
  %v184 = vld [vmem:[%s3 + $0x30] sm:$0xff]
  %v185 = vld [vmem:[%s3 + $0x38] sm:$0xff]
  %v186 = vld [vmem:[%s3 + $0x40] sm:$0xff]
  %v187 = vld [vmem:[%s3 + $0x48] sm:$0xff]
  %v188 = vld [vmem:[%s3 + $0x50] sm:$0xff]
  %v189 = vld [vmem:[%s3 + $0x58] sm:$0xff]
  %v190 = vld [vmem:[%s3 + $0x60] sm:$0xff]
  %v191 = vld [vmem:[%s3 + $0x68] sm:$0xff]
  %v192 = vld [vmem:[%s3 + $0x70] sm:$0xff]
  %v193 = vld [vmem:[%s3 + $0x78] sm:$0xff]
  %v194 = vld [vmem:[%s4] sm:$0x1]
  %v196 = vperm.slane %v194, 0
  %198 = vmatpush.msra.mxu0 %v193
  %199 = vmatpush.msra.mxu0 %v192
  %200 = vmatpush.msra.mxu0 %v191
  %201 = vmatpush.msra.mxu0 %v190
  %202 = vmatpush.msra.mxu0 %v189
  %203 = vmatpush.msra.mxu0 %v188
  %204 = vmatpush.msra.mxu0 %v187
  %205 = vmatpush.msra.mxu0 %v186
  %206 = vmatpush.msra.mxu0 %v185
  %207 = vmatpush.msra.mxu0 %v184
  %208 = vmatpush.msra.mxu0 %v183
  %209 = vmatpush.msra.mxu0 %v182
  %210 = vmatpush.msra.mxu0 %v181
  %211 = vmatpush.msra.mxu0 %v180
  %212 = vmatpush.msra.mxu0 %v179
  %213 = vmatpush.msra.mxu0 %v178
  %214 = vmatmul.f32.gmra.mxu0 %v162
  %v215 = vpop.f32.mrf.mxu0
  %v216 = vadd.f32 %v196, %v215
  %217 = vmatmul.f32.gmra.mxu0 %v163
  %v218 = vpop.f32.mrf.mxu0
  %v219 = vadd.f32 %v196, %v218
  %220 = vmatmul.f32.gmra.mxu0 %v164
  %v221 = vpop.f32.mrf.mxu0
  %v222 = vadd.f32 %v196, %v221
  %223 = vmatmul.f32.gmra.mxu0 %v165
  %v224 = vpop.f32.mrf.mxu0
  %v225 = vadd.f32 %v196, %v224
  %226 = vmatmul.f32.gmra.mxu0 %v166
  %v227 = vpop.f32.mrf.mxu0
  %v228 = vadd.f32 %v196, %v227
  %229 = vmatmul.f32.gmra.mxu0 %v167
  %v230 = vpop.f32.mrf.mxu0
  %v231 = vadd.f32 %v196, %v230
  %232 = vmatmul.f32.gmra.mxu0 %v168
  %v233 = vpop.f32.mrf.mxu0
  %v234 = vadd.f32 %v196, %v233
  %235 = vmatmul.f32.gmra.mxu0 %v169
  %v236 = vpop.f32.mrf.mxu0
  %v237 = vadd.f32 %v196, %v236
  %238 = vmatmul.f32.gmra.mxu0 %v170
  %v239 = vpop.f32.mrf.mxu0
  %v240 = vadd.f32 %v196, %v239
  %241 = vmatmul.f32.gmra.mxu0 %v171
  %v242 = vpop.f32.mrf.mxu0
  %v243 = vadd.f32 %v196, %v242
  %244 = vmatmul.f32.gmra.mxu0 %v172
  %v245 = vpop.f32.mrf.mxu0
  %v246 = vadd.f32 %v196, %v245
  %247 = vmatmul.f32.gmra.mxu0 %v173
  %v248 = vpop.f32.mrf.mxu0
  %v249 = vadd.f32 %v196, %v248
  %250 = vmatmul.f32.gmra.mxu0 %v174
  %v251 = vpop.f32.mrf.mxu0
  %v252 = vadd.f32 %v196, %v251
  %253 = vmatmul.f32.gmra.mxu0 %v175
  %v254 = vpop.f32.mrf.mxu0
  %v255 = vadd.f32 %v196, %v254
  %256 = vmatmul.f32.gmra.mxu0 %v176
  %v257 = vpop.f32.mrf.mxu0
  %v258 = vadd.f32 %v196, %v257
  %259 = vmatmul.f32.gmra.mxu0 %v177
  %v260 = vpop.f32.mrf.mxu0
  %v261 = vadd.f32 %v196, %v260
  %262 = vdwg.mxu0
  %v263 = vtanh.pop %v216
  %v264 = vtanh.pop %v219
  %v265 = vtanh.pop %v222
  %v266 = vtanh.pop %v225
  %v267 = vtanh.pop %v228
  %v268 = vtanh.pop %v231
  %v269 = vtanh.pop %v234
  %v270 = vtanh.pop %v237
  %v271 = vtanh.pop %v240
  %v272 = vtanh.pop %v243
  %v273 = vtanh.pop %v246
  %v274 = vtanh.pop %v249
  %v275 = vtanh.pop %v252
  %v276 = vtanh.pop %v255
  %v277 = vtanh.pop %v258
  %v278 = vtanh.pop %v261
  %v279 = vld [vmem:[%s5] sm:$0xff]
  %v280 = vld [vmem:[%s5 + $0x8] sm:$0xff]
  %v281 = vld [vmem:[%s5 + $0x10] sm:$0xff]
  %v282 = vld [vmem:[%s5 + $0x18] sm:$0xff]
  %v283 = vld [vmem:[%s5 + $0x20] sm:$0xff]
  %v284 = vld [vmem:[%s5 + $0x28] sm:$0xff]
  %v285 = vld [vmem:[%s5 + $0x30] sm:$0xff]
  %v286 = vld [vmem:[%s5 + $0x38] sm:$0xff]
  %v287 = vld [vmem:[%s5 + $0x40] sm:$0xff]
  %v288 = vld [vmem:[%s5 + $0x48] sm:$0xff]
  %v289 = vld [vmem:[%s5 + $0x50] sm:$0xff]
  %v290 = vld [vmem:[%s5 + $0x58] sm:$0xff]
  %v291 = vld [vmem:[%s5 + $0x60] sm:$0xff]
  %v292 = vld [vmem:[%s5 + $0x68] sm:$0xff]
  %v293 = vld [vmem:[%s5 + $0x70] sm:$0xff]
  %v294 = vld [vmem:[%s5 + $0x78] sm:$0xff]
  %v295 = vld [vmem:[%s6] sm:$0x1]
  %v297 = vperm.slane %v295, 0
  %299 = vmatpush.msra.mxu0 %v294
  %300 = vmatpush.msra.mxu0 %v293
  %301 = vmatpush.msra.mxu0 %v292
  %302 = vmatpush.msra.mxu0 %v291
  %303 = vmatpush.msra.mxu0 %v290
  %304 = vmatpush.msra.mxu0 %v289
  %305 = vmatpush.msra.mxu0 %v288
  %306 = vmatpush.msra.mxu0 %v287
  %307 = vmatpush.msra.mxu0 %v286
  %308 = vmatpush.msra.mxu0 %v285
  %309 = vmatpush.msra.mxu0 %v284
  %310 = vmatpush.msra.mxu0 %v283
  %311 = vmatpush.msra.mxu0 %v282
  %312 = vmatpush.msra.mxu0 %v281
  %313 = vmatpush.msra.mxu0 %v280
  %314 = vmatpush.msra.mxu0 %v279
  %315 = vmatmul.f32.gmra.mxu0 %v263
  %v316 = vpop.f32.mrf.mxu0
  %v317 = vadd.f32 %v297, %v316
  %318 = vmatmul.f32.gmra.mxu0 %v264
  %v319 = vpop.f32.mrf.mxu0
  %v320 = vadd.f32 %v297, %v319
  %321 = vmatmul.f32.gmra.mxu0 %v265
  %v322 = vpop.f32.mrf.mxu0
  %v323 = vadd.f32 %v297, %v322
  %324 = vmatmul.f32.gmra.mxu0 %v266
  %v325 = vpop.f32.mrf.mxu0
  %v326 = vadd.f32 %v297, %v325
  %327 = vmatmul.f32.gmra.mxu0 %v267
  %v328 = vpop.f32.mrf.mxu0
  %v329 = vadd.f32 %v297, %v328
  %330 = vmatmul.f32.gmra.mxu0 %v268
  %v331 = vpop.f32.mrf.mxu0
  %v332 = vadd.f32 %v297, %v331
  %333 = vmatmul.f32.gmra.mxu0 %v269
  %v334 = vpop.f32.mrf.mxu0
  %v335 = vadd.f32 %v297, %v334
  %336 = vmatmul.f32.gmra.mxu0 %v270
  %v337 = vpop.f32.mrf.mxu0
  %v338 = vadd.f32 %v297, %v337
  %339 = vmatmul.f32.gmra.mxu0 %v271
  %v340 = vpop.f32.mrf.mxu0
  %v341 = vadd.f32 %v297, %v340
  %342 = vmatmul.f32.gmra.mxu0 %v272
  %v343 = vpop.f32.mrf.mxu0
  %v344 = vadd.f32 %v297, %v343
  %345 = vmatmul.f32.gmra.mxu0 %v273
  %v346 = vpop.f32.mrf.mxu0
  %v347 = vadd.f32 %v297, %v346
  %348 = vmatmul.f32.gmra.mxu0 %v274
  %v349 = vpop.f32.mrf.mxu0
  %v350 = vadd.f32 %v297, %v349
  %351 = vmatmul.f32.gmra.mxu0 %v275
  %v352 = vpop.f32.mrf.mxu0
  %v353 = vadd.f32 %v297, %v352
  %354 = vmatmul.f32.gmra.mxu0 %v276
  %v355 = vpop.f32.mrf.mxu0
  %v356 = vadd.f32 %v297, %v355
  %357 = vmatmul.f32.gmra.mxu0 %v277
  %v358 = vpop.f32.mrf.mxu0
  %v359 = vadd.f32 %v297, %v358
  %360 = vmatmul.f32.gmra.mxu0 %v278
  %v361 = vpop.f32.mrf.mxu0
  %v362 = vadd.f32 %v297, %v361
  %363 = vdwg.mxu0
  %vm364 = vcmask 64512
  %365 = vst.msk [vmem:[%s7] sm:$0xff] %vm364, %v317
  %366 = vst.msk [vmem:[%s7 + $0x8] sm:$0xff] %vm364, %v320
  %367 = vst.msk [vmem:[%s7 + $0x10] sm:$0xff] %vm364, %v323
  %368 = vst.msk [vmem:[%s7 + $0x18] sm:$0xff] %vm364, %v326
  %369 = vst.msk [vmem:[%s7 + $0x20] sm:$0xff] %vm364, %v329
  %370 = vst.msk [vmem:[%s7 + $0x28] sm:$0xff] %vm364, %v332
  %371 = vst.msk [vmem:[%s7 + $0x30] sm:$0xff] %vm364, %v335
  %372 = vst.msk [vmem:[%s7 + $0x38] sm:$0xff] %vm364, %v338
  %373 = vst.msk [vmem:[%s7 + $0x40] sm:$0xff] %vm364, %v341
  %374 = vst.msk [vmem:[%s7 + $0x48] sm:$0xff] %vm364, %v344
  %375 = vst.msk [vmem:[%s7 + $0x50] sm:$0xff] %vm364, %v347
  %376 = vst.msk [vmem:[%s7 + $0x58] sm:$0xff] %vm364, %v350
  %377 = vst.msk [vmem:[%s7 + $0x60] sm:$0xff] %vm364, %v353
  %378 = vst.msk [vmem:[%s7 + $0x68] sm:$0xff] %vm364, %v356
  %379 = vst.msk [vmem:[%s7 + $0x70] sm:$0xff] %vm364, %v359
  %380 = vst.msk [vmem:[%s7 + $0x78] sm:$0xff] %vm364, %v362
  // Predicated region
  $region30: #{tpu_custom_call.1} parent=0 // pred_check
    _
  $region31: #{tpu_custom_call.1} parent=0 // pred_check_branch
    %382 = sbr.rel (0) target = $region33
  $region32: #{tpu_custom_call.1} parent=0 // pred_region
    _
  $region33: #{tpu_custom_call.1} parent=0 // pred_fallthru
    _
  // Predicated region
  $region34: #{tpu_custom_call.1} parent=0 // pred_check
    _
  $region35: #{tpu_custom_call.1} parent=0 // pred_check_branch
    %384 = sbr.rel (0) target = $region37
  $region36: #{tpu_custom_call.1} parent=0 // pred_region
    _
  $region37: #{tpu_custom_call.1} parent=0 // pred_fallthru
    _

</llo_original>
